<compile_context>
chip_gen: v5e
topology: v5e:2x2
jax: 0.10.0
libtpu: 0.0.40
codegen_flags: <defaults>
</compile_context>

<pallas_src>
import functools

import jax
import jax.numpy as jnp
from jax.experimental import pallas as pl
from jax.experimental.pallas import tpu as pltpu


def _round_up(x, m):
    return ((x + m - 1) // m) * m


def _dcm_kernel(*refs, k, num_hidden):
    x_ref = refs[0]
    hidden_refs = refs[1:1 + num_hidden]
    wh_ref = refs[1 + num_hidden]        # fused [gate | expert] weight, (lastdim, 2k)
    out_ref = refs[2 + num_hidden]       # fused output, (TM, 2k)

    # MLP embedding: Linear(bias=False) + ReLU6 per hidden layer.
    h = x_ref[...]
    for w_ref in hidden_refs:
        h = jnp.clip(
            jnp.dot(h, w_ref[...], preferred_element_type=jnp.float32), 0.0, 6.0)

    # One fused head matmul: columns [0:k] are the gate logits, [k:2k] the expert.
    heads = jnp.dot(h, wh_ref[...], preferred_element_type=jnp.float32)

    col = jax.lax.broadcasted_iota(jnp.int32, heads.shape, 1)
    is_gate = col < k

    # log-softmax over the k gate columns only (masked reductions; no slicing,
    # no concat -> single lane-dense store of the whole (TM, 2k) tile).
    gate_vals = jnp.where(is_gate, heads, -jnp.inf)
    m = jnp.max(gate_vals, axis=-1, keepdims=True)
    s = jnp.sum(jnp.where(is_gate, jnp.exp(heads - m), 0.0),
                axis=-1, keepdims=True)
    lse = m + jnp.log(s)

    log_gate = heads - lse
    log_hazard = jnp.clip(heads, -0.7, 0.7)
    out_ref[...] = jnp.where(is_gate, log_gate, log_hazard)


def prepare_dcm_params(hidden_weights, w_gate, w_expert):
    """One-time weight prep, hoisted out of the per-call hot path.

    PyTorch nn.Linear stores weights as (out, in); transpose to (in, out) so the
    kernel computes plain `h @ W`, and fuse the two k-wide heads into a single
    (lastdim, 2k) matrix [gate | expert].
    """
    hidden_t = tuple(jnp.transpose(w) for w in hidden_weights)
    w_heads = jnp.transpose(jnp.concatenate([w_gate, w_expert], axis=0))
    return hidden_t, w_heads, int(w_gate.shape[0])


def deep_cox_mixtures_forward(x, hidden_ws_t, w_heads, k, *, block_rows=1024):
    """x: (N, inputdim) f32; hidden_ws_t / w_heads from prepare_dcm_params."""
    n, d = x.shape
    two_k = w_heads.shape[1]
    num_hidden = len(hidden_ws_t)

    # Row tile: multiple of 8 (sublane), capped so the per-step working set is
    # tiny even on v7x (64 MiB VMEM). Pad the batch so the tile divides it.
    tm = min(block_rows, _round_up(n, 8))
    n_pad = _round_up(n, tm)
    if n_pad != n:
        x = jnp.pad(x, ((0, n_pad - n), (0, 0)))
    grid = (n_pad // tm,)

    weight_spec = lambda w: pl.BlockSpec(w.shape, lambda i: (0, 0))
    in_specs = ([pl.BlockSpec((tm, d), lambda i: (i, 0))]
                + [weight_spec(w) for w in hidden_ws_t]
                + [weight_spec(w_heads)])
    out_spec = pl.BlockSpec((tm, two_k), lambda i: (i, 0))

    kernel = functools.partial(_dcm_kernel, k=k, num_hidden=num_hidden)
    fused = pl.pallas_call(
        kernel,
        out_shape=jax.ShapeDtypeStruct((n_pad, two_k), jnp.float32),
        grid=grid,
        in_specs=in_specs,
        out_specs=out_spec,
        compiler_params=pltpu.CompilerParams(
            dimension_semantics=("parallel",)),
    )(x, *hidden_ws_t, w_heads)

    fused = fused[:n]
    return fused[:, :k], fused[:, k:]


def _reference(x, w1, w2, w_gate, w_expert):
    h = jnp.clip(x @ w1.T, 0.0, 6.0)
    h = jnp.clip(h @ w2.T, 0.0, 6.0)
    lh = jnp.clip(h @ w_expert.T, -0.7, 0.7)
    g = h @ w_gate.T
    lg = g - jax.scipy.special.logsumexp(g, axis=1, keepdims=True)
    return lg, lh


if __name__ == "__main__":
    # Small shapes consistent with the module: inputdim=16, layers=[32, 32], k=3.
    # batch=10 also exercises the row-padding path (not a multiple of 8).
    batch, inputdim, hidden, k = 10, 16, 32, 3

    key = jax.random.PRNGKey(0)
    kx, k1, k2, kg, ke = jax.random.split(key, 5)

    x = jax.random.normal(kx, (batch, inputdim), dtype=jnp.float32)
    # deterministic synthetic weights, PyTorch (out_features, in_features) layout
    w1 = jax.random.normal(k1, (hidden, inputdim), dtype=jnp.float32) * 0.1
    w2 = jax.random.normal(k2, (hidden, hidden), dtype=jnp.float32) * 0.1
    w_gate = jax.random.normal(kg, (k, hidden), dtype=jnp.float32) * 0.1
    w_expert = jax.random.normal(ke, (k, hidden), dtype=jnp.float32) * 0.1

    # One-time weight prep (transpose + head fusion), then the tiled kernel call.
    hidden_ws_t, w_heads, k_ = prepare_dcm_params((w1, w2), w_gate, w_expert)
    log_gate, log_hazard = deep_cox_mixtures_forward(x, hidden_ws_t, w_heads, k_)
    jax.block_until_ready((log_gate, log_hazard))

    ref_lg, ref_lh = _reference(x, w1, w2, w_gate, w_expert)
    assert log_gate.shape == (batch, k) and log_hazard.shape == (batch, k)
    assert jnp.allclose(log_gate, ref_lg, atol=1e-5), "log_gate mismatch"
    assert jnp.allclose(log_hazard, ref_lh, atol=1e-5), "log_hazard mismatch"

    print("KERNEL_OK")
</pallas_src>

<mosaic_0001>
module attributes {stable_mosaic.version = 11 : i64} {
  func.func @_dcm_kernel(%arg0: i32, %arg1: memref<16x16xf32, #tpu.memory_space<vmem>>, %arg2: memref<16x32xf32, #tpu.memory_space<vmem>>, %arg3: memref<32x32xf32, #tpu.memory_space<vmem>>, %arg4: memref<32x6xf32, #tpu.memory_space<vmem>>, %arg5: memref<16x6xf32, #tpu.memory_space<vmem>>) attributes {dimension_semantics = [#tpu.dimension_semantics<parallel>], iteration_bounds = array<i64: 1>, scalar_prefetch = 0 : i64, scratch_operands = 0 : i64, tpu.core_type = #tpu.core_type<tc>, window_params = [{transform_indices = @transform_0, window_bounds = array<i64: 16, 16>}, {pipeline_mode = #tpu.pipeline_mode<synchronous>, transform_indices = @transform_1, window_bounds = array<i64: 16, 32>}, {pipeline_mode = #tpu.pipeline_mode<synchronous>, transform_indices = @transform_2, window_bounds = array<i64: 32, 32>}, {pipeline_mode = #tpu.pipeline_mode<synchronous>, transform_indices = @transform_3, window_bounds = array<i64: 32, 6>}, {transform_indices = @transform_4, window_bounds = array<i64: 16, 6>}]} {
    %c0 = arith.constant 0 : index
    %c0_0 = arith.constant 0 : index
    %0 = vector.load %arg1[%c0, %c0_0] : memref<16x16xf32, #tpu.memory_space<vmem>>, vector<16x16xf32>
    %c0_1 = arith.constant 0 : index
    %c0_2 = arith.constant 0 : index
    %1 = vector.load %arg2[%c0_1, %c0_2] : memref<16x32xf32, #tpu.memory_space<vmem>>, vector<16x32xf32>
    %cst = arith.constant dense<0.000000e+00> : vector<16x32xf32>
    %2 = tpu.matmul %0, %1, %cst {dimension_numbers = #tpu.dot_dimension_numbers<[1], [0], [0], [1], [0, 0, 1, 1], [], []>} : vector<16x16xf32>, vector<16x32xf32>, vector<16x32xf32> -> vector<16x32xf32>
    %cst_3 = arith.constant 0.000000e+00 : f32
    %cst_4 = arith.constant 6.000000e+00 : f32
    %3 = vector.broadcast %cst_3 : f32 to vector<16x32xf32>
    %4 = arith.maximumf %3, %2 : vector<16x32xf32>
    %5 = vector.broadcast %cst_4 : f32 to vector<16x32xf32>
    %6 = arith.minimumf %5, %4 : vector<16x32xf32>
    %c0_5 = arith.constant 0 : index
    %c0_6 = arith.constant 0 : index
    %7 = vector.load %arg3[%c0_5, %c0_6] : memref<32x32xf32, #tpu.memory_space<vmem>>, vector<32x32xf32>
    %cst_7 = arith.constant dense<0.000000e+00> : vector<16x32xf32>
    %8 = tpu.matmul %6, %7, %cst_7 {dimension_numbers = #tpu.dot_dimension_numbers<[1], [0], [0], [1], [0, 0, 1, 1], [], []>} : vector<16x32xf32>, vector<32x32xf32>, vector<16x32xf32> -> vector<16x32xf32>
    %cst_8 = arith.constant 0.000000e+00 : f32
    %cst_9 = arith.constant 6.000000e+00 : f32
    %9 = vector.broadcast %cst_8 : f32 to vector<16x32xf32>
    %10 = arith.maximumf %9, %8 : vector<16x32xf32>
    %11 = vector.broadcast %cst_9 : f32 to vector<16x32xf32>
    %12 = arith.minimumf %11, %10 : vector<16x32xf32>
    %c0_10 = arith.constant 0 : index
    %c0_11 = arith.constant 0 : index
    %13 = vector.load %arg4[%c0_10, %c0_11] : memref<32x6xf32, #tpu.memory_space<vmem>>, vector<32x6xf32>
    %cst_12 = arith.constant dense<0.000000e+00> : vector<16x6xf32>
    %14 = tpu.matmul %12, %13, %cst_12 {dimension_numbers = #tpu.dot_dimension_numbers<[1], [0], [0], [1], [0, 0, 1, 1], [], []>} : vector<16x32xf32>, vector<32x6xf32>, vector<16x6xf32> -> vector<16x6xf32>
    %15 = tpu.iota {dimensions = array<i32: 1>} : vector<16x6xi32>
    %c3_i32 = arith.constant 3 : i32
    %16 = vector.broadcast %c3_i32 : i32 to vector<16x6xi32>
    %17 = arith.cmpi slt, %15, %16 : vector<16x6xi32>
    %cst_13 = arith.constant 0xFF800000 : f32
    %18 = vector.broadcast %cst_13 : f32 to vector<16x6xf32>
    %19 = arith.select %17, %14, %18 : vector<16x6xi1>, vector<16x6xf32>
    %cst_14 = arith.constant dense<0xFF800000> : vector<16xf32>
    %20 = vector.multi_reduction <maximumf>, %19, %cst_14 [1] : vector<16x6xf32> to vector<16xf32>
    %21 = vector.shape_cast %20 : vector<16xf32> to vector<16x1xf32>
    %22 = vector.broadcast %21 : vector<16x1xf32> to vector<16x6xf32>
    %23 = arith.subf %14, %22 : vector<16x6xf32>
    %24 = math.exp %23 : vector<16x6xf32>
    %cst_15 = arith.constant 0.000000e+00 : f32
    %25 = vector.broadcast %cst_15 : f32 to vector<16x6xf32>
    %26 = arith.select %17, %24, %25 : vector<16x6xi1>, vector<16x6xf32>
    %cst_16 = arith.constant dense<0.000000e+00> : vector<16xf32>
    %27 = vector.multi_reduction <add>, %26, %cst_16 [1] : vector<16x6xf32> to vector<16xf32>
    %28 = vector.shape_cast %27 : vector<16xf32> to vector<16x1xf32>
    %29 = math.log %28 : vector<16x1xf32>
    %30 = arith.addf %21, %29 : vector<16x1xf32>
    %31 = vector.broadcast %30 : vector<16x1xf32> to vector<16x6xf32>
    %32 = arith.subf %14, %31 : vector<16x6xf32>
    %cst_17 = arith.constant -0.699999988 : f32
    %cst_18 = arith.constant 0.699999988 : f32
    %33 = vector.broadcast %cst_17 : f32 to vector<16x6xf32>
    %34 = arith.maximumf %33, %14 : vector<16x6xf32>
    %35 = vector.broadcast %cst_18 : f32 to vector<16x6xf32>
    %36 = arith.minimumf %35, %34 : vector<16x6xf32>
    %37 = arith.select %17, %32, %36 : vector<16x6xi1>, vector<16x6xf32>
    %c0_19 = arith.constant 0 : index
    %c0_20 = arith.constant 0 : index
    %38 = vector.load %arg5[%c0_19, %c0_20] : memref<16x6xf32, #tpu.memory_space<vmem>>, vector<16x6xf32>
    tpu.vector_store %arg5[%c0_19, %c0_20], %37 {strides = array<i32>} : memref<16x6xf32, #tpu.memory_space<vmem>>, vector<16x6xf32>,
    return
  }
  func.func @transform_0(%arg0: i32) -> (i32, i32) {
    %c0_i32 = arith.constant 0 : i32
    %c0_i32_0 = arith.constant 0 : i32
    return %arg0, %c0_i32 : i32, i32
  }
  func.func @transform_1(%arg0: i32) -> (i32, i32) {
    %c0_i32 = arith.constant 0 : i32
    %c0_i32_0 = arith.constant 0 : i32
    %c0_i32_1 = arith.constant 0 : i32
    return %c0_i32, %c0_i32_0 : i32, i32
  }
  func.func @transform_2(%arg0: i32) -> (i32, i32) {
    %c0_i32 = arith.constant 0 : i32
    %c0_i32_0 = arith.constant 0 : i32
    %c0_i32_1 = arith.constant 0 : i32
    return %c0_i32, %c0_i32_0 : i32, i32
  }
  func.func @transform_3(%arg0: i32) -> (i32, i32) {
    %c0_i32 = arith.constant 0 : i32
    %c0_i32_0 = arith.constant 0 : i32
    %c0_i32_1 = arith.constant 0 : i32
    return %c0_i32, %c0_i32_0 : i32, i32
  }
  func.func @transform_4(%arg0: i32) -> (i32, i32) {
    %c0_i32 = arith.constant 0 : i32
    %c0_i32_0 = arith.constant 0 : i32
    return %arg0, %c0_i32 : i32, i32
  }
}

</mosaic_0001>

<llo_original>
// kernel: tpu_custom_call.1
$region0: #{tpu_custom_call.1}
  #allocation0 [shape = 'u32[]', space=smem, size = 0x4, offset = 0x4, fixed_abs, tag = 'smem constant byte address 0x4 - core index']
  #allocation1 [shape = 'u32[72,128]{1,0:T(1,128)}', space=vmem, size = 0x9000, scoped, tag = 'internal scratch']
  %s0 = inlined_call_operand.hbm [shape: f32[16,16], index: 0, kind: input, shape index: {}]
  %s1 = inlined_call_operand.hbm [shape: f32[16,32], index: 1, kind: input, shape index: {}]
  %s2 = inlined_call_operand.vmem [shape: f32[32,32], index: 2, kind: input, shape index: {}]
  %s3 = inlined_call_operand.vmem [shape: f32[32,6], index: 3, kind: input, shape index: {}]
  %s4 = inlined_call_operand.vmem [shape: f32[16,6], index: 4, kind: output, shape index: {}]
  %s5 = sld [smem:[#allocation0]]
  $region34: #{tpu_custom_call.1} parent=0
    _
  %s7 = ssub.s32 1, %s5
  %s8 = scalar_select 0, %s7, %s5
  $region1: #{tpu_custom_call.1} parent=0
    #allocation2 [shape = 'u8[8192]{0}', space=vmem, size = 0x2000, scoped, tag = 'input window, operand 0, single buffered']
    #allocation3 [shape = 's32[1]{0}', space=sflag, size = 0x4, scoped, tag = 'scoped memory for tpu_custom_call.1']
    #allocation4 [shape = 'u8[8192]{0}', space=vmem, size = 0x2000, scoped, tag = 'input window, operand 1, single buffered']
    #allocation5 [shape = 's32[1]{0}', space=sflag, size = 0x4, scoped, tag = 'scoped memory for tpu_custom_call.1']
    %9 = vsyncpa [#allocation3], 0
    %10 = vsyncpa [#allocation5], 0
    // Predicated region
    $region2: #{tpu_custom_call.1} parent=1 // pred_check
      _
    $region3: #{tpu_custom_call.1} parent=1 // pred_check_branch
      %12 = sbr.rel (0) target = $region5
    $region4: #{tpu_custom_call.1} parent=1 // pred_region
      %14 = vsyncadd [#allocation3], 0
      %s15 = sshll.u32 %s0, 4
      %s16 = int_to_ptr.hbm [resolvable:$true] %s15
      %s17 = sshll.u32 [#allocation2], 4
      %s18 = int_to_ptr.vmem [resolvable:$true] %s17
      %23 = dma.hbm_to_vmem [thread:$0]  %s16, 256, %s18, [#allocation3], 128, 128, 8
    $region5: #{tpu_custom_call.1} parent=1 // pred_fallthru
      _
    // Predicated region
    $region6: #{tpu_custom_call.1} parent=1 // pred_check
      _
    $region7: #{tpu_custom_call.1} parent=1 // pred_check_branch
      %25 = sbr.rel (0) target = $region9
    $region8: #{tpu_custom_call.1} parent=1 // pred_region
      %27 = vsyncadd [#allocation5], 0
      %s28 = sshll.u32 %s1, 4
      %s29 = int_to_ptr.hbm [resolvable:$true] %s28
      %s30 = sshll.u32 [#allocation4], 4
      %s31 = int_to_ptr.vmem [resolvable:$true] %s30
      %36 = dma.hbm_to_vmem [thread:$0]  %s29, 256, %s31, [#allocation5], 128, 128, 8
    $region9: #{tpu_custom_call.1} parent=1 // pred_fallthru
      _
    // Predicated region
    $region10: #{tpu_custom_call.1} parent=1 // pred_check
      _
    $region11: #{tpu_custom_call.1} parent=1 // pred_check_branch
      %38 = sbr.rel (0) target = $region13
    $region12: #{tpu_custom_call.1} parent=1 // pred_region
      _
    $region13: #{tpu_custom_call.1} parent=1 // pred_fallthru
      _
    // Predicated region
    $region14: #{tpu_custom_call.1} parent=1 // pred_check
      _
    $region15: #{tpu_custom_call.1} parent=1 // pred_check_branch
      %40 = sbr.rel (0) target = $region17
    $region16: #{tpu_custom_call.1} parent=1 // pred_region
      _
    $region17: #{tpu_custom_call.1} parent=1 // pred_fallthru
      _
    // Predicated region
    $region18: #{tpu_custom_call.1} parent=1 // pred_check
      _
    $region19: #{tpu_custom_call.1} parent=1 // pred_check_branch
      %42 = sbr.rel (0) target = $region21
    $region20: #{tpu_custom_call.1} parent=1 // pred_region
      %44 = dma.done [#allocation3], 256
    $region21: #{tpu_custom_call.1} parent=1 // pred_fallthru
      _
    // Predicated region
    $region22: #{tpu_custom_call.1} parent=1 // pred_check
      _
    $region23: #{tpu_custom_call.1} parent=1 // pred_check_branch
      %46 = sbr.rel (0) target = $region25
    $region24: #{tpu_custom_call.1} parent=1 // pred_region
      %48 = dma.done [#allocation5], 256
    $region25: #{tpu_custom_call.1} parent=1 // pred_fallthru
      _
    %v49 = vld [vmem:[#allocation2] sm:$0xff]
    %v50 = vld [vmem:[#allocation2 + $0x8] sm:$0xff]
    %v51 = vld [vmem:[#allocation4] sm:$0xff]
    %v52 = vld [vmem:[#allocation4 + $0x8] sm:$0xff]
    %vm53 = vcmask 130048
    %v55 = vsel %vm53, %v49, 0
    %v58 = vsel %vm53, %v50, 0
    %60 = vmatpush.msra.mxu0 0.0
    %61 = vmatpush.msra.mxu0 0.0
    %62 = vmatpush.msra.mxu0 0.0
    %63 = vmatpush.msra.mxu0 0.0
    %64 = vmatpush.msra.mxu0 0.0
    %65 = vmatpush.msra.mxu0 0.0
    %66 = vmatpush.msra.mxu0 0.0
    %67 = vmatpush.msra.mxu0 0.0
    %68 = vmatpush.msra.mxu0 0.0
    %69 = vmatpush.msra.mxu0 0.0
    %70 = vmatpush.msra.mxu0 0.0
    %71 = vmatpush.msra.mxu0 0.0
    %72 = vmatpush.msra.mxu0 0.0
    %73 = vmatpush.msra.mxu0 0.0
    %74 = vmatpush.msra.mxu0 %v52
    %75 = vmatpush.msra.mxu0 %v51
    %76 = vmatmul.f32.gmra.mxu0 %v55
    %v77 = vpop.f32.mrf.mxu0
    %v78 = vadd.f32 0.0, %v77
    %79 = vmatmul.f32.gmra.mxu0 %v58
    %v80 = vpop.f32.mrf.mxu0
    %v81 = vadd.f32 0.0, %v80
    %82 = vdwg.mxu0
    %v83 = vmax.f32 %v78, 0.0
    %v84 = vmax.f32 %v81, 0.0
    %v85 = vmin.f32 %v83, 6.0
    %v86 = vmin.f32 %v84, 6.0
    %v87 = vld [vmem:[%s2] sm:$0xff]
    %v88 = vld [vmem:[%s2 + $0x8] sm:$0xff]
    %v89 = vld [vmem:[%s2 + $0x10] sm:$0xff]
    %v90 = vld [vmem:[%s2 + $0x18] sm:$0xff]
    %vm91 = vcmask 261120
    %v93 = vsel %vm91, %v85, 0
    %v96 = vsel %vm91, %v86, 0
    %98 = vmatpush.msra.mxu0 0.0
    %99 = vmatpush.msra.mxu0 0.0
    %100 = vmatpush.msra.mxu0 0.0
    %101 = vmatpush.msra.mxu0 0.0
    %102 = vmatpush.msra.mxu0 0.0
    %103 = vmatpush.msra.mxu0 0.0
    %104 = vmatpush.msra.mxu0 0.0
    %105 = vmatpush.msra.mxu0 0.0
    %106 = vmatpush.msra.mxu0 0.0
    %107 = vmatpush.msra.mxu0 0.0
    %108 = vmatpush.msra.mxu0 0.0
    %109 = vmatpush.msra.mxu0 0.0
    %110 = vmatpush.msra.mxu0 %v90
    %111 = vmatpush.msra.mxu0 %v89
    %112 = vmatpush.msra.mxu0 %v88
    %113 = vmatpush.msra.mxu0 %v87
    %114 = vmatmul.f32.gmra.mxu0 %v93
    %v115 = vpop.f32.mrf.mxu0
    %v116 = vadd.f32 0.0, %v115
    %117 = vmatmul.f32.gmra.mxu0 %v96
    %v118 = vpop.f32.mrf.mxu0
    %v119 = vadd.f32 0.0, %v118
    %120 = vdwg.mxu0
    %v121 = vmax.f32 %v116, 0.0
    %v122 = vmax.f32 %v119, 0.0
    %v123 = vmin.f32 %v121, 6.0
    %v124 = vmin.f32 %v122, 6.0
    %v125 = vld [vmem:[%s3] sm:$0xff]
    %v126 = vld [vmem:[%s3 + $0x8] sm:$0xff]
    %v127 = vld [vmem:[%s3 + $0x10] sm:$0xff]
    %v128 = vld [vmem:[%s3 + $0x18] sm:$0xff]
    %v130 = vsel %vm91, %v123, 0
    %v133 = vsel %vm91, %v124, 0
    %135 = vmatpush.msra.mxu0 0.0
    %136 = vmatpush.msra.mxu0 0.0
    %137 = vmatpush.msra.mxu0 0.0
    %138 = vmatpush.msra.mxu0 0.0
    %139 = vmatpush.msra.mxu0 0.0
    %140 = vmatpush.msra.mxu0 0.0
    %141 = vmatpush.msra.mxu0 0.0
    %142 = vmatpush.msra.mxu0 0.0
    %143 = vmatpush.msra.mxu0 0.0
    %144 = vmatpush.msra.mxu0 0.0
    %145 = vmatpush.msra.mxu0 0.0
    %146 = vmatpush.msra.mxu0 0.0
    %147 = vmatpush.msra.mxu0 %v128
    %148 = vmatpush.msra.mxu0 %v127
    %149 = vmatpush.msra.mxu0 %v126
    %150 = vmatpush.msra.mxu0 %v125
    %151 = vmatmul.f32.gmra.mxu0 %v130
    %v152 = vpop.f32.mrf.mxu0
    %v153 = vadd.f32 0.0, %v152
    %154 = vmatmul.f32.gmra.mxu0 %v133
    %v155 = vpop.f32.mrf.mxu0
    %v156 = vadd.f32 0.0, %v155
    %157 = vdwg.mxu0
    %v158 = vlaneseq
    %v159 = vand.u32 %v158, 127
    %vm160 = vcmp.lt.s32.totalorder %v159, 3
    %v161 = vsel %vm160, %v153, -inf
    %v162 = vsel %vm160, %v156, -inf
    %vm163 = vcmask 48128
    %v164 = vsel %vm163, %v161, -inf
    %165 = vmax.xlane.f32.xlu0 %v164
    %v166 = vpop.xlane.xlu0 %165
    %v167 = vsel %vm163, %v162, -inf
    %168 = vmax.xlane.f32.xlu0 %v167
    %v169 = vpop.xlane.xlu0 %168
    %v170 = vsub.f32 %v153, %v166
    %v171 = vsub.f32 %v156, %v169
    %v172 = vmul.f32 %v170, 1.442695
    %v173 = vpow.pop %v172
    %v174 = vmul.f32 %v171, 1.442695
    %v175 = vpow.pop %v174
    %v176 = vsel %vm160, %v173, 0.0
    %v177 = vsel %vm160, %v175, 0.0
    %v178 = vsel %vm163, %v176, 0.0
    %179 = vadd.xlane.f32.xlu0 %v178
    %v180 = vpop.xlane.xlu0 %179
    %v181 = vsel %vm163, %v177, 0.0
    %182 = vadd.xlane.f32.xlu0 %v181
    %v183 = vpop.xlane.xlu0 %182
    %v184 = vlog2.pop %v180
    %v185 = vmul.f32 %v184, 0.6931472
    %v186 = vlog2.pop %v183
    %v187 = vmul.f32 %v186, 0.6931472
    %v188 = vadd.f32 %v166, %v185
    %v189 = vadd.f32 %v169, %v187
    %v190 = vsub.f32 %v153, %v188
    %v191 = vsub.f32 %v156, %v189
    %v192 = vmax.f32 %v153, -0.7
    %v193 = vmax.f32 %v156, -0.7
    %v194 = vmin.f32 %v192, 0.7
    %v195 = vmin.f32 %v193, 0.7
    %v196 = vsel %vm160, %v190, %v194
    %v197 = vsel %vm160, %v191, %v195
    %198 = vst.msk [vmem:[%s4] sm:$0xff] %vm163, %v196
    %199 = vst.msk [vmem:[%s4 + $0x8] sm:$0xff] %vm163, %v197
    // Predicated region
    $region26: #{tpu_custom_call.1} parent=1 // pred_check
      _
    $region27: #{tpu_custom_call.1} parent=1 // pred_check_branch
      %201 = sbr.rel (0) target = $region29
    $region28: #{tpu_custom_call.1} parent=1 // pred_region
      _
    $region29: #{tpu_custom_call.1} parent=1 // pred_fallthru
      _
    // Predicated region
    $region30: #{tpu_custom_call.1} parent=1 // pred_check
      _
    $region31: #{tpu_custom_call.1} parent=1 // pred_check_branch
      %203 = sbr.rel (0) target = $region33
    $region32: #{tpu_custom_call.1} parent=1 // pred_region
      _
    $region33: #{tpu_custom_call.1} parent=1 // pred_fallthru
      _
    %204 = vsyncpa [#allocation3], 1
    %205 = vsyncpa [#allocation5], 1

</llo_original>
